<compile_context>
chip_gen: v5e
topology: v5e:2x2
jax: 0.10.0
libtpu: 0.0.40
codegen_flags: <defaults>
</compile_context>

<pallas_src>
import jax
import jax.numpy as jnp
from jax.experimental import pallas as pl
from jax.experimental.pallas import tpu as pltpu

BN_EPS = 1e-5
LANE = 128
SUBLANE = 8
MAX_ROW_TILE = 512   # M-tile for the gridded (no-BN) path.


def _round_up(n, m):
    return (n + m - 1) // m * m


def _pad2d(a, rows, cols):
    r, c = a.shape
    return jnp.pad(a, ((0, rows - r), (0, cols - c)))


def _vmem_capacity_bytes():
    try:
        return int(pltpu.get_tpu_info().vmem_capacity_bytes)
    except Exception:
        return 64 * 1024 * 1024  # conservative (v7x per-TC VMEM)


# ---------------- fused kernel ----------------

def _make_fused_mlp_kernel(num_hidden, batch_norm, m_real, tile_rows, act_dtype):
    """kernel(x, [W, (gamma;beta)|b]*num_hidden, W_out, b_out, out)."""
    need_row_fix = batch_norm and (tile_rows != m_real)
    n_pad_rows = float(tile_rows - m_real)
    inv_m = 1.0 / float(m_real)

    def kernel(*refs):
        x_ref = refs[0]
        o_ref = refs[-1]
        params = refs[1:-1]

        h = x_ref[...]  # already act_dtype (bf16 on v6e/v7x, f32 on v5e)

        if need_row_fix:
            row = jax.lax.broadcasted_iota(jnp.int32, (tile_rows, 1), 0)
            row_mask = (row < m_real).astype(jnp.float32)

        idx = 0
        for _ in range(num_hidden):
            w_ref = params[idx]
            vec_ref = params[idx + 1]
            idx += 2

            y = jnp.dot(h, w_ref[...], preferred_element_type=jnp.float32)

            if batch_norm:
                # Linear bias dropped: train-mode BN cancels any per-column
                # constant, and the bias-free matmul keeps padded rows exactly
                # 0 so the batch statistics need no elementwise row mask.
                gb = vec_ref[...]            # (2, F): [gamma; beta]
                gamma = gb[0:1, :]
                beta = gb[1:2, :]
                mean = jnp.sum(y, axis=0, keepdims=True) * inv_m
                yc = y - mean
                sumsq = jnp.sum(yc * yc, axis=0, keepdims=True)
                if need_row_fix:
                    # padded rows of y are exactly 0 -> yc == -mean there.
                    sumsq = sumsq - n_pad_rows * (mean * mean)
                var = sumsq * inv_m
                # gamma is zero-padded, so padded feature columns stay 0.
                scale = gamma * jax.lax.rsqrt(var + BN_EPS)
                h = jnp.maximum(yc * scale + beta, 0.0)
                if need_row_fix:
                    h = h * row_mask   # keep padded rows exactly 0 for next layer
            else:
                h = jnp.maximum(y + vec_ref[...], 0.0)

            h = h.astype(act_dtype)

        w_out_ref, b_out_ref = params[idx], params[idx + 1]
        out = jnp.dot(h, w_out_ref[...], preferred_element_type=jnp.float32)
        o_ref[...] = (out + b_out_ref[...]).astype(o_ref.dtype)

    return kernel


# ---------------- MLP module ----------------

class MLPPallas:
    def __init__(self, h_sizes, out_size, batch_norm, key, use_bf16_matmul=True):
        self.batch_norm = batch_norm
        self.use_bf16_matmul = use_bf16_matmul
        self.out_size = out_size
        self.act_dtype = jnp.bfloat16 if use_bf16_matmul else jnp.float32

        self.hidden = []   # unpadded (W, b) for the pure-JAX reference
        self.bn = []       # unpadded (gamma, beta)
        padded = []        # flat, padded, pre-cast params in kernel-arg order

        def init_linear(key, f_in, f_out):
            key, kw, kb = jax.random.split(key, 3)
            bound = 1.0 / (f_in ** 0.5)
            W = jax.random.uniform(kw, (f_in, f_out), jnp.float32, -bound, bound)
            b = jax.random.uniform(kb, (f_out,), jnp.float32, -bound, bound)
            return key, W, b

        for k in range(len(h_sizes) - 1):
            f_in, f_out = h_sizes[k], h_sizes[k + 1]
            key, W, b = init_linear(key, f_in, f_out)
            self.hidden.append((W, b))
            f_in_p, f_out_p = _round_up(f_in, LANE), _round_up(f_out, LANE)
            padded.append(_pad2d(W, f_in_p, f_out_p).astype(self.act_dtype))
            if batch_norm:
                # freshly-initialized BatchNorm1d: gamma=1, beta=0
                gamma = jnp.ones((f_out,), jnp.float32)
                beta = jnp.zeros((f_out,), jnp.float32)
                self.bn.append((gamma, beta))
                gb = jnp.stack([gamma, beta], axis=0)       # (2, f_out)
                padded.append(_pad2d(gb, 2, f_out_p))        # gamma pad lanes = 0
            else:
                padded.append(_pad2d(b.reshape(1, f_out), 1, f_out_p))

        f_in, f_out = h_sizes[-1], out_size
        key, W, b = init_linear(key, f_in, f_out)
        self.out_w, self.out_b = W, b
        f_in_p, f_out_p = _round_up(f_in, LANE), _round_up(f_out, LANE)
        padded.append(_pad2d(W, f_in_p, f_out_p).astype(self.act_dtype))
        padded.append(_pad2d(b.reshape(1, f_out), 1, f_out_p))

        self.padded_params = padded
        self.num_hidden = len(self.hidden)
        self._max_f_pad = max(_round_up(s, LANE) for s in list(h_sizes) + [out_size])
        self._param_bytes = sum(int(p.size) * p.dtype.itemsize for p in padded)
        self._vmem_cap = _vmem_capacity_bytes()
        self._forward = jax.jit(self._forward_impl)

    # ---- jitted forward (retraces per distinct (B, S) shape) ----
    def _forward_impl(self, x, *padded_params):
        B, S, F_in = x.shape
        M = B * S
        F_in_pad = _round_up(F_in, LANE)
        F_out_pad = _round_up(self.out_size, LANE)

        if self.batch_norm:
            # BN needs full-batch statistics before the next matmul:
            # one tile holds the whole (padded) batch.
            tm = max(_round_up(M, SUBLANE), SUBLANE)
        else:
            tm = min(MAX_ROW_TILE, max(_round_up(M, SUBLANE), SUBLANE))
        M_pad = _round_up(max(M, tm), tm)
        num_m_tiles = M_pad // tm

        h = x.reshape(M, F_in).astype(self.act_dtype)
        h = _pad2d(h, M_pad, F_in_pad)

        kernel = _make_fused_mlp_kernel(
            num_hidden=self.num_hidden, batch_norm=self.batch_norm,
            m_real=M, tile_rows=tm, act_dtype=self.act_dtype)

        in_specs = [pl.BlockSpec((tm, F_in_pad), lambda i: (i, 0))]
        # weights / vector params: constant index_map -> stay VMEM-resident
        in_specs += [pl.BlockSpec(p.shape, lambda i: (0, 0)) for p in padded_params]
        out_spec = pl.BlockSpec((tm, F_out_pad), lambda i: (i, 0))

        # VMEM budget from actual footprint, capped by per-generation capacity.
        x_item = jnp.dtype(self.act_dtype).itemsize
        work = tm * self._max_f_pad * 16                      # y(f32)+h+temporaries
        io = 2 * tm * (F_in_pad * x_item + F_out_pad * 4)     # double-buffered x/out
        footprint = self._param_bytes + work + io
        vmem_limit = max(16 << 20,
                         min(2 * footprint + (4 << 20), int(self._vmem_cap * 0.9)))

        out = pl.pallas_call(
            kernel,
            out_shape=jax.ShapeDtypeStruct((M_pad, F_out_pad), jnp.float32),
            grid=(num_m_tiles,),
            in_specs=in_specs,
            out_specs=out_spec,
            compiler_params=pltpu.CompilerParams(
                dimension_semantics=("arbitrary",) if self.batch_norm
                else ("parallel",),
                vmem_limit_bytes=int(vmem_limit)),
        )(h, *padded_params)

        return out[:M, :self.out_size].reshape(B, S, self.out_size)

    def __call__(self, x):
        # x: (B, S, F_in).  BN statistics over M = B*S rows match PyTorch's
        # transpose(1,2) -> BatchNorm1d -> transpose(1,2) in training mode.
        return self._forward(x, *self.padded_params)

    # pure-JAX reference (keeps the Linear bias; train-mode BN cancels it)
    def reference(self, x):
        B, S, _ = x.shape
        h = x.reshape(B * S, -1).astype(jnp.float32)

        def mm(a, w):
            if self.use_bf16_matmul:
                return jnp.dot(a.astype(jnp.bfloat16), w.astype(jnp.bfloat16),
                               preferred_element_type=jnp.float32)
            return jnp.dot(a, w, preferred_element_type=jnp.float32)

        for i, (W, b) in enumerate(self.hidden):
            y = mm(h, W) + b
            if self.batch_norm:
                gamma, beta = self.bn[i]
                mean = y.mean(0, keepdims=True)
                var = jnp.mean((y - mean) ** 2, axis=0, keepdims=True)
                y = gamma * (y - mean) * jax.lax.rsqrt(var + BN_EPS) + beta
            h = jnp.maximum(y, 0.0)
        y = mm(h, self.out_w) + self.out_b
        return y.reshape(B, S, -1)


if __name__ == "__main__":
    key = jax.random.PRNGKey(0)
    kx, kp, kp2, kx2 = jax.random.split(key, 4)

    B, S = 2, 8
    h_sizes = [32, 64, 48]
    out_size = 16

    x = jax.random.normal(kx, (B, S, h_sizes[0]), jnp.float32)

    # with batch norm (single-tile grid, full-batch stats)
    mlp = MLPPallas(h_sizes, out_size, batch_norm=True, key=kp)
    out = jax.block_until_ready(mlp(x))
    ref = mlp.reference(x)
    assert out.shape == (B, S, out_size)
    assert jnp.allclose(out, ref, atol=1e-3, rtol=1e-3), \
        float(jnp.max(jnp.abs(out - ref)))

    # batch norm with a non-8-aligned row count (exercises the padded-row fixup)
    x_odd = jax.random.normal(kx2, (3, 5, h_sizes[0]), jnp.float32)
    out_odd = jax.block_until_ready(mlp(x_odd))
    ref_odd = mlp.reference(x_odd)
    assert out_odd.shape == (3, 5, out_size)
    assert jnp.allclose(out_odd, ref_odd, atol=1e-3, rtol=1e-3), \
        float(jnp.max(jnp.abs(out_odd - ref_odd)))

    # without batch norm (gridded over M, parallel semantics)
    mlp2 = MLPPallas(h_sizes, out_size, batch_norm=False, key=kp2)
    out2 = jax.block_until_ready(mlp2(x))
    ref2 = mlp2.reference(x)
    assert jnp.allclose(out2, ref2, atol=1e-3, rtol=1e-3), \
        float(jnp.max(jnp.abs(out2 - ref2)))

    print("KERNEL_OK")
</pallas_src>

<mosaic_0001>
module attributes {stable_mosaic.version = 11 : i64} {
  func.func @kernel(%arg0: i32, %arg1: memref<16x128xbf16, #tpu.memory_space<vmem>>, %arg2: memref<128x128xbf16, #tpu.memory_space<vmem>>, %arg3: memref<2x128xf32, #tpu.memory_space<vmem>>, %arg4: memref<128x128xbf16, #tpu.memory_space<vmem>>, %arg5: memref<2x128xf32, #tpu.memory_space<vmem>>, %arg6: memref<128x128xbf16, #tpu.memory_space<vmem>>, %arg7: memref<1x128xf32, #tpu.memory_space<vmem>>, %arg8: memref<16x128xf32, #tpu.memory_space<vmem>>) attributes {dimension_semantics = [#tpu.dimension_semantics<arbitrary>], iteration_bounds = array<i64: 1>, scalar_prefetch = 0 : i64, scratch_operands = 0 : i64, tpu.core_type = #tpu.core_type<tc>, window_params = [{transform_indices = @transform_0, window_bounds = array<i64: 16, 128>}, {pipeline_mode = #tpu.pipeline_mode<synchronous>, transform_indices = @transform_1, window_bounds = array<i64: 128, 128>}, {pipeline_mode = #tpu.pipeline_mode<synchronous>, transform_indices = @transform_2, window_bounds = array<i64: 2, 128>}, {pipeline_mode = #tpu.pipeline_mode<synchronous>, transform_indices = @transform_3, window_bounds = array<i64: 128, 128>}, {pipeline_mode = #tpu.pipeline_mode<synchronous>, transform_indices = @transform_4, window_bounds = array<i64: 2, 128>}, {pipeline_mode = #tpu.pipeline_mode<synchronous>, transform_indices = @transform_5, window_bounds = array<i64: 128, 128>}, {pipeline_mode = #tpu.pipeline_mode<synchronous>, transform_indices = @transform_6, window_bounds = array<i64: 1, 128>}, {transform_indices = @transform_7, window_bounds = array<i64: 16, 128>}]} {
    %c0 = arith.constant 0 : index
    %c0_0 = arith.constant 0 : index
    %0 = vector.load %arg1[%c0, %c0_0] : memref<16x128xbf16, #tpu.memory_space<vmem>>, vector<16x128xbf16>
    %c0_1 = arith.constant 0 : index
    %c0_2 = arith.constant 0 : index
    %1 = vector.load %arg2[%c0_1, %c0_2] : memref<128x128xbf16, #tpu.memory_space<vmem>>, vector<128x128xbf16>
    %cst = arith.constant dense<0.000000e+00> : vector<16x128xf32>
    %2 = tpu.matmul %0, %1, %cst {dimension_numbers = #tpu.dot_dimension_numbers<[1], [0], [0], [1], [0, 0, 1, 1], [], []>} : vector<16x128xbf16>, vector<128x128xbf16>, vector<16x128xf32> -> vector<16x128xf32>
    %c0_3 = arith.constant 0 : index
    %c0_4 = arith.constant 0 : index
    %3 = vector.load %arg3[%c0_3, %c0_4] : memref<2x128xf32, #tpu.memory_space<vmem>>, vector<2x128xf32>
    %4 = vector.extract_strided_slice %3 {offsets = [0, 0], sizes = [1, 128], strides = [1, 1]} : vector<2x128xf32> to vector<1x128xf32>
    %5 = vector.extract_strided_slice %3 {offsets = [1, 0], sizes = [1, 128], strides = [1, 1]} : vector<2x128xf32> to vector<1x128xf32>
    %cst_5 = arith.constant dense<0.000000e+00> : vector<128xf32>
    %6 = vector.multi_reduction <add>, %2, %cst_5 [0] : vector<16x128xf32> to vector<128xf32>
    %7 = vector.shape_cast %6 : vector<128xf32> to vector<1x128xf32>
    %cst_6 = arith.constant 6.250000e-02 : f32
    %8 = vector.broadcast %cst_6 : f32 to vector<1x128xf32>
    %9 = arith.mulf %7, %8 : vector<1x128xf32>
    %10 = vector.broadcast %9 : vector<1x128xf32> to vector<16x128xf32>
    %11 = arith.subf %2, %10 : vector<16x128xf32>
    %12 = arith.mulf %11, %11 : vector<16x128xf32>
    %cst_7 = arith.constant dense<0.000000e+00> : vector<128xf32>
    %13 = vector.multi_reduction <add>, %12, %cst_7 [0] : vector<16x128xf32> to vector<128xf32>
    %14 = vector.shape_cast %13 : vector<128xf32> to vector<1x128xf32>
    %cst_8 = arith.constant 6.250000e-02 : f32
    %15 = vector.broadcast %cst_8 : f32 to vector<1x128xf32>
    %16 = arith.mulf %14, %15 : vector<1x128xf32>
    %cst_9 = arith.constant 9.99999974E-6 : f32
    %17 = vector.broadcast %cst_9 : f32 to vector<1x128xf32>
    %18 = arith.addf %16, %17 : vector<1x128xf32>
    %19 = math.rsqrt %18 : vector<1x128xf32>
    %20 = arith.mulf %4, %19 : vector<1x128xf32>
    %21 = vector.broadcast %20 : vector<1x128xf32> to vector<16x128xf32>
    %22 = arith.mulf %11, %21 : vector<16x128xf32>
    %23 = vector.broadcast %5 : vector<1x128xf32> to vector<16x128xf32>
    %24 = arith.addf %22, %23 : vector<16x128xf32>
    %cst_10 = arith.constant 0.000000e+00 : f32
    %25 = vector.broadcast %cst_10 : f32 to vector<16x128xf32>
    %26 = arith.maximumf %24, %25 : vector<16x128xf32>
    %27 = arith.truncf %26 : vector<16x128xf32> to vector<16x128xbf16>
    %c0_11 = arith.constant 0 : index
    %c0_12 = arith.constant 0 : index
    %28 = vector.load %arg4[%c0_11, %c0_12] : memref<128x128xbf16, #tpu.memory_space<vmem>>, vector<128x128xbf16>
    %cst_13 = arith.constant dense<0.000000e+00> : vector<16x128xf32>
    %29 = tpu.matmul %27, %28, %cst_13 {dimension_numbers = #tpu.dot_dimension_numbers<[1], [0], [0], [1], [0, 0, 1, 1], [], []>} : vector<16x128xbf16>, vector<128x128xbf16>, vector<16x128xf32> -> vector<16x128xf32>
    %c0_14 = arith.constant 0 : index
    %c0_15 = arith.constant 0 : index
    %30 = vector.load %arg5[%c0_14, %c0_15] : memref<2x128xf32, #tpu.memory_space<vmem>>, vector<2x128xf32>
    %31 = vector.extract_strided_slice %30 {offsets = [0, 0], sizes = [1, 128], strides = [1, 1]} : vector<2x128xf32> to vector<1x128xf32>
    %32 = vector.extract_strided_slice %30 {offsets = [1, 0], sizes = [1, 128], strides = [1, 1]} : vector<2x128xf32> to vector<1x128xf32>
    %cst_16 = arith.constant dense<0.000000e+00> : vector<128xf32>
    %33 = vector.multi_reduction <add>, %29, %cst_16 [0] : vector<16x128xf32> to vector<128xf32>
    %34 = vector.shape_cast %33 : vector<128xf32> to vector<1x128xf32>
    %cst_17 = arith.constant 6.250000e-02 : f32
    %35 = vector.broadcast %cst_17 : f32 to vector<1x128xf32>
    %36 = arith.mulf %34, %35 : vector<1x128xf32>
    %37 = vector.broadcast %36 : vector<1x128xf32> to vector<16x128xf32>
    %38 = arith.subf %29, %37 : vector<16x128xf32>
    %39 = arith.mulf %38, %38 : vector<16x128xf32>
    %cst_18 = arith.constant dense<0.000000e+00> : vector<128xf32>
    %40 = vector.multi_reduction <add>, %39, %cst_18 [0] : vector<16x128xf32> to vector<128xf32>
    %41 = vector.shape_cast %40 : vector<128xf32> to vector<1x128xf32>
    %cst_19 = arith.constant 6.250000e-02 : f32
    %42 = vector.broadcast %cst_19 : f32 to vector<1x128xf32>
    %43 = arith.mulf %41, %42 : vector<1x128xf32>
    %cst_20 = arith.constant 9.99999974E-6 : f32
    %44 = vector.broadcast %cst_20 : f32 to vector<1x128xf32>
    %45 = arith.addf %43, %44 : vector<1x128xf32>
    %46 = math.rsqrt %45 : vector<1x128xf32>
    %47 = arith.mulf %31, %46 : vector<1x128xf32>
    %48 = vector.broadcast %47 : vector<1x128xf32> to vector<16x128xf32>
    %49 = arith.mulf %38, %48 : vector<16x128xf32>
    %50 = vector.broadcast %32 : vector<1x128xf32> to vector<16x128xf32>
    %51 = arith.addf %49, %50 : vector<16x128xf32>
    %cst_21 = arith.constant 0.000000e+00 : f32
    %52 = vector.broadcast %cst_21 : f32 to vector<16x128xf32>
    %53 = arith.maximumf %51, %52 : vector<16x128xf32>
    %54 = arith.truncf %53 : vector<16x128xf32> to vector<16x128xbf16>
    %c0_22 = arith.constant 0 : index
    %c0_23 = arith.constant 0 : index
    %55 = vector.load %arg6[%c0_22, %c0_23] : memref<128x128xbf16, #tpu.memory_space<vmem>>, vector<128x128xbf16>
    %cst_24 = arith.constant dense<0.000000e+00> : vector<16x128xf32>
    %56 = tpu.matmul %54, %55, %cst_24 {dimension_numbers = #tpu.dot_dimension_numbers<[1], [0], [0], [1], [0, 0, 1, 1], [], []>} : vector<16x128xbf16>, vector<128x128xbf16>, vector<16x128xf32> -> vector<16x128xf32>
    %c0_25 = arith.constant 0 : index
    %c0_26 = arith.constant 0 : index
    %57 = vector.load %arg7[%c0_25, %c0_26] : memref<1x128xf32, #tpu.memory_space<vmem>>, vector<1x128xf32>
    %58 = vector.broadcast %57 : vector<1x128xf32> to vector<16x128xf32>
    %59 = arith.addf %56, %58 : vector<16x128xf32>
    %c0_27 = arith.constant 0 : index
    %c0_28 = arith.constant 0 : index
    %60 = vector.load %arg8[%c0_27, %c0_28] : memref<16x128xf32, #tpu.memory_space<vmem>>, vector<16x128xf32>
    tpu.vector_store %arg8[%c0_27, %c0_28], %59 {strides = array<i32>} : memref<16x128xf32, #tpu.memory_space<vmem>>, vector<16x128xf32>,
    return
  }
  func.func @transform_0(%arg0: i32) -> (i32, i32) {
    %c0_i32 = arith.constant 0 : i32
    %c0_i32_0 = arith.constant 0 : i32
    return %arg0, %c0_i32 : i32, i32
  }
  func.func @transform_1(%arg0: i32) -> (i32, i32) {
    %c0_i32 = arith.constant 0 : i32
    %c0_i32_0 = arith.constant 0 : i32
    %c0_i32_1 = arith.constant 0 : i32
    return %c0_i32, %c0_i32_0 : i32, i32
  }
  func.func @transform_2(%arg0: i32) -> (i32, i32) {
    %c0_i32 = arith.constant 0 : i32
    %c0_i32_0 = arith.constant 0 : i32
    %c0_i32_1 = arith.constant 0 : i32
    return %c0_i32, %c0_i32_0 : i32, i32
  }
  func.func @transform_3(%arg0: i32) -> (i32, i32) {
    %c0_i32 = arith.constant 0 : i32
    %c0_i32_0 = arith.constant 0 : i32
    %c0_i32_1 = arith.constant 0 : i32
    return %c0_i32, %c0_i32_0 : i32, i32
  }
  func.func @transform_4(%arg0: i32) -> (i32, i32) {
    %c0_i32 = arith.constant 0 : i32
    %c0_i32_0 = arith.constant 0 : i32
    %c0_i32_1 = arith.constant 0 : i32
    return %c0_i32, %c0_i32_0 : i32, i32
  }
  func.func @transform_5(%arg0: i32) -> (i32, i32) {
    %c0_i32 = arith.constant 0 : i32
    %c0_i32_0 = arith.constant 0 : i32
    %c0_i32_1 = arith.constant 0 : i32
    return %c0_i32, %c0_i32_0 : i32, i32
  }
  func.func @transform_6(%arg0: i32) -> (i32, i32) {
    %c0_i32 = arith.constant 0 : i32
    %c0_i32_0 = arith.constant 0 : i32
    %c0_i32_1 = arith.constant 0 : i32
    return %c0_i32, %c0_i32_0 : i32, i32
  }
  func.func @transform_7(%arg0: i32) -> (i32, i32) {
    %c0_i32 = arith.constant 0 : i32
    %c0_i32_0 = arith.constant 0 : i32
    return %arg0, %c0_i32 : i32, i32
  }
}

</mosaic_0001>

<llo_original>
// kernel: _forward_impl.1
$region0: #{_forward_impl.1}
  #allocation0 [shape = 'u32[]', space=smem, size = 0x4, offset = 0x4, fixed_abs, tag = 'smem constant byte address 0x4 - core index']
  #allocation1 [shape = 'u32[72,128]{1,0:T(1,128)}', space=vmem, size = 0x9000, scoped, tag = 'internal scratch']
  %s0 = inlined_call_operand.vmem [shape: bf16[16,128], index: 0, kind: input, shape index: {}]
  %s1 = inlined_call_operand.hbm [shape: bf16[128,128], index: 1, kind: input, shape index: {}]
  %s2 = inlined_call_operand.vmem [shape: f32[2,128], index: 2, kind: input, shape index: {}]
  %s3 = inlined_call_operand.hbm [shape: bf16[128,128], index: 3, kind: input, shape index: {}]
  %s4 = inlined_call_operand.vmem [shape: f32[2,128], index: 4, kind: input, shape index: {}]
  %s5 = inlined_call_operand.hbm [shape: bf16[128,128], index: 5, kind: input, shape index: {}]
  %s6 = inlined_call_operand.vmem [shape: f32[1,128], index: 6, kind: input, shape index: {}]
  %s7 = inlined_call_operand.vmem [shape: f32[16,128], index: 7, kind: output, shape index: {}]
  %s8 = sld [smem:[#allocation0]]
  $region50: #{_forward_impl.1} parent=0
    _
  %s10 = ssub.s32 1, %s8
  %s11 = scalar_select 0, %s10, %s8
  $region1: #{_forward_impl.1} parent=0
    #allocation2 [shape = 'u8[32768]{0}', space=vmem, size = 0x8000, scoped, tag = 'input window, operand 1, single buffered']
    #allocation3 [shape = 's32[1]{0}', space=sflag, size = 0x4, scoped, tag = 'scoped memory for _forward_impl.1']
    #allocation4 [shape = 'u8[32768]{0}', space=vmem, size = 0x8000, scoped, tag = 'input window, operand 3, single buffered']
    #allocation5 [shape = 's32[1]{0}', space=sflag, size = 0x4, scoped, tag = 'scoped memory for _forward_impl.1']
    #allocation6 [shape = 'u8[32768]{0}', space=vmem, size = 0x8000, scoped, tag = 'input window, operand 5, single buffered']
    %12 = vsyncpa [#allocation3], 0
    %13 = vsyncpa [#allocation5], 0
    // Predicated region
    $region2: #{_forward_impl.1} parent=1 // pred_check
      _
    $region3: #{_forward_impl.1} parent=1 // pred_check_branch
      %15 = sbr.rel (0) target = $region5
    $region4: #{_forward_impl.1} parent=1 // pred_region
      _
    $region5: #{_forward_impl.1} parent=1 // pred_fallthru
      _
    // Predicated region
    $region6: #{_forward_impl.1} parent=1 // pred_check
      _
    $region7: #{_forward_impl.1} parent=1 // pred_check_branch
      %17 = sbr.rel (0) target = $region9
    $region8: #{_forward_impl.1} parent=1 // pred_region
      %19 = vsyncadd [#allocation3], 0
      %s20 = sshll.u32 %s1, 4
      %s21 = int_to_ptr.hbm [resolvable:$true] %s20
      %s22 = sshll.u32 [#allocation2], 4
      %s23 = int_to_ptr.vmem [resolvable:$true] %s22
      %28 = dma.hbm_to_vmem [thread:$0]  %s21, 1024, %s23, [#allocation3], 64, 64, 4
    $region9: #{_forward_impl.1} parent=1 // pred_fallthru
      _
    // Predicated region
    $region10: #{_forward_impl.1} parent=1 // pred_check
      _
    $region11: #{_forward_impl.1} parent=1 // pred_check_branch
      %30 = sbr.rel (0) target = $region13
    $region12: #{_forward_impl.1} parent=1 // pred_region
      _
    $region13: #{_forward_impl.1} parent=1 // pred_fallthru
      _
    // Predicated region
    $region14: #{_forward_impl.1} parent=1 // pred_check
      _
    $region15: #{_forward_impl.1} parent=1 // pred_check_branch
      %32 = sbr.rel (0) target = $region17
    $region16: #{_forward_impl.1} parent=1 // pred_region
      %34 = vsyncadd [#allocation5], 0
      %s35 = sshll.u32 %s3, 4
      %s36 = int_to_ptr.hbm [resolvable:$true] %s35
      %s37 = sshll.u32 [#allocation4], 4
      %s38 = int_to_ptr.vmem [resolvable:$true] %s37
      %43 = dma.hbm_to_vmem [thread:$0]  %s36, 1024, %s38, [#allocation5], 64, 64, 4
    $region17: #{_forward_impl.1} parent=1 // pred_fallthru
      _
    // Predicated region
    $region18: #{_forward_impl.1} parent=1 // pred_check
      _
    $region19: #{_forward_impl.1} parent=1 // pred_check_branch
      %45 = sbr.rel (0) target = $region21
    $region20: #{_forward_impl.1} parent=1 // pred_region
      _
    $region21: #{_forward_impl.1} parent=1 // pred_fallthru
      _
    // Predicated region
    $region22: #{_forward_impl.1} parent=1 // pred_check
      _
    $region23: #{_forward_impl.1} parent=1 // pred_check_branch
      %47 = sbr.rel (0) target = $region25
    $region24: #{_forward_impl.1} parent=1 // pred_region
      %49 = vsyncadd [#allocation5], 0
      %s50 = sshll.u32 %s5, 4
      %s51 = int_to_ptr.hbm [resolvable:$true] %s50
      %s52 = sshll.u32 [#allocation6], 4
      %s53 = int_to_ptr.vmem [resolvable:$true] %s52
      %58 = dma.hbm_to_vmem [thread:$0]  %s51, 1024, %s53, [#allocation5], 64, 64, 4
    $region25: #{_forward_impl.1} parent=1 // pred_fallthru
      _
    // Predicated region
    $region26: #{_forward_impl.1} parent=1 // pred_check
      _
    $region27: #{_forward_impl.1} parent=1 // pred_check_branch
      %60 = sbr.rel (0) target = $region29
    $region28: #{_forward_impl.1} parent=1 // pred_region
      _
    $region29: #{_forward_impl.1} parent=1 // pred_fallthru
      _
    // Predicated region
    $region30: #{_forward_impl.1} parent=1 // pred_check
      _
    $region31: #{_forward_impl.1} parent=1 // pred_check_branch
      %62 = sbr.rel (0) target = $region33
    $region32: #{_forward_impl.1} parent=1 // pred_region
      %64 = dma.done [#allocation3], 1024
    $region33: #{_forward_impl.1} parent=1 // pred_fallthru
      _
    // Predicated region
    $region34: #{_forward_impl.1} parent=1 // pred_check
      _
    $region35: #{_forward_impl.1} parent=1 // pred_check_branch
      %66 = sbr.rel (0) target = $region37
    $region36: #{_forward_impl.1} parent=1 // pred_region
      %68 = dma.done [#allocation5], 1024
    $region37: #{_forward_impl.1} parent=1 // pred_fallthru
      _
    // Predicated region
    $region38: #{_forward_impl.1} parent=1 // pred_check
      _
    $region39: #{_forward_impl.1} parent=1 // pred_check_branch
      %70 = sbr.rel (0) target = $region41
    $region40: #{_forward_impl.1} parent=1 // pred_region
      %72 = dma.done [#allocation5], 1024
    $region41: #{_forward_impl.1} parent=1 // pred_fallthru
      _
    %v73 = vld [vmem:[%s0] sm:$0xf]
    %v74 = vld [vmem:[%s0 + $0x4] sm:$0xf]
    %v75 = vld [vmem:[#allocation2] sm:$0xf]
    %v76 = vld [vmem:[#allocation2 + $0x4] sm:$0xf]
    %v77 = vld [vmem:[#allocation2 + $0x8] sm:$0xf]
    %v78 = vld [vmem:[#allocation2 + $0xc] sm:$0xf]
    %v79 = vld [vmem:[#allocation2 + $0x10] sm:$0xf]
    %v80 = vld [vmem:[#allocation2 + $0x14] sm:$0xf]
    %v81 = vld [vmem:[#allocation2 + $0x18] sm:$0xf]
    %v82 = vld [vmem:[#allocation2 + $0x1c] sm:$0xf]
    %v83 = vld [vmem:[#allocation2 + $0x20] sm:$0xf]
    %v84 = vld [vmem:[#allocation2 + $0x24] sm:$0xf]
    %v85 = vld [vmem:[#allocation2 + $0x28] sm:$0xf]
    %v86 = vld [vmem:[#allocation2 + $0x2c] sm:$0xf]
    %v87 = vld [vmem:[#allocation2 + $0x30] sm:$0xf]
    %v88 = vld [vmem:[#allocation2 + $0x34] sm:$0xf]
    %v89 = vld [vmem:[#allocation2 + $0x38] sm:$0xf]
    %v90 = vld [vmem:[#allocation2 + $0x3c] sm:$0xf]
    %v93 = vunpack.c.l.b16 %v73
    %v94 = vunpack.c.l.b16 %v74
    %v95 = vpack.c.b16 %v94, %v93
    %v113 = vunpack.c.l.b16 %v75
    %v114 = vunpack.c.l.b16 %v76
    %v115 = vunpack.c.l.b16 %v77
    %v116 = vunpack.c.l.b16 %v78
    %v117 = vunpack.c.l.b16 %v79
    %v118 = vunpack.c.l.b16 %v80
    %v119 = vunpack.c.l.b16 %v81
    %v120 = vunpack.c.l.b16 %v82
    %v121 = vunpack.c.l.b16 %v83
    %v122 = vunpack.c.l.b16 %v84
    %v123 = vunpack.c.l.b16 %v85
    %v124 = vunpack.c.l.b16 %v86
    %v125 = vunpack.c.l.b16 %v87
    %v126 = vunpack.c.l.b16 %v88
    %v127 = vunpack.c.l.b16 %v89
    %v128 = vunpack.c.l.b16 %v90
    %v129 = vpack.c.b16 %v114, %v113
    %v130 = vpack.c.b16 %v116, %v115
    %v131 = vpack.c.b16 %v118, %v117
    %v132 = vpack.c.b16 %v120, %v119
    %v133 = vpack.c.b16 %v122, %v121
    %v134 = vpack.c.b16 %v124, %v123
    %v135 = vpack.c.b16 %v126, %v125
    %v136 = vpack.c.b16 %v128, %v127
    %145 = vmatpush.bf16.msra.mxu0 %v136
    %146 = vmatpush.bf16.msra.mxu0 %v135
    %147 = vmatpush.bf16.msra.mxu0 %v134
    %148 = vmatpush.bf16.msra.mxu0 %v133
    %149 = vmatpush.bf16.msra.mxu0 %v132
    %150 = vmatpush.bf16.msra.mxu0 %v131
    %151 = vmatpush.bf16.msra.mxu0 %v130
    %152 = vmatpush.bf16.msra.mxu0 %v129
    %153 = vmatmul.bf16.gmra.mxu0 %v95
    %v154 = vpop.f32.mrf.mxu0
    %v155 = vadd.f32 0.0, %v154
    %v156 = vpop.f32.mrf.mxu0
    %v157 = vadd.f32 0.0, %v156
    %158 = vdwg.mxu0
    %v159 = vld [vmem:[%s2] sm:$0x3]
    %v160 = vadd.f32 %v155, %v157
    %v161 = vrot.slane %v160, 4
    %v162 = vadd.f32 %v160, %v161
    %v163 = vrot.slane %v162, 2
    %v164 = vadd.f32 %v162, %v163
    %v165 = vrot.slane %v164, 1
    %v166 = vadd.f32 %v164, %v165
    %v167 = vmul.f32 %v166, 0.0625
    %v168 = vsub.f32 %v155, %v167
    %v169 = vsub.f32 %v157, %v167
    %v170 = vmul.f32 %v168, %v168
    %v171 = vmul.f32 %v169, %v169
    %v172 = vadd.f32 %v170, %v171
    %v173 = vrot.slane %v172, 4
    %v174 = vadd.f32 %v172, %v173
    %v175 = vrot.slane %v174, 2
    %v176 = vadd.f32 %v174, %v175
    %v177 = vrot.slane %v176, 1
    %v178 = vadd.f32 %v176, %v177
    %v179 = vmul.f32 %v178, 0.0625
    %v180 = vadd.f32 %v179, 1e-05
    %v181 = vrsqrt.pop %v180
    %v182 = vmul.f32 %v181, %v180
    %v183 = vmul.f32 %v182, %v181
    %v184 = vmul.f32 0.5, %v183
    %v185 = vsub.f32 1.5, %v184
    %v186 = vmul.f32 %v181, %v185
    %vm187 = vweird.f32 %v180
    %vm188 = vweird.f32 %v181
    %vm189 = vmor %vm187, %vm188
    %v190 = vsel %vm189, %v181, %v186
    %v191 = vmul.f32 %v159, %v190
    %v192 = vperm.slane %v191, 0
    %v193 = vmul.f32 %v168, %v192
    %v194 = vmul.f32 %v169, %v192
    %v195 = vperm.slane %v159, 1
    %v196 = vadd.f32 %v193, %v195
    %v197 = vadd.f32 %v194, %v195
    %v198 = vmax.f32 %v196, 0.0
    %v199 = vmax.f32 %v197, 0.0
    %v200 = vpack.c.bf16 %v199, %v198
    %v201 = vld [vmem:[#allocation4] sm:$0xf]
    %v202 = vld [vmem:[#allocation4 + $0x4] sm:$0xf]
    %v203 = vld [vmem:[#allocation4 + $0x8] sm:$0xf]
    %v204 = vld [vmem:[#allocation4 + $0xc] sm:$0xf]
    %v205 = vld [vmem:[#allocation4 + $0x10] sm:$0xf]
    %v206 = vld [vmem:[#allocation4 + $0x14] sm:$0xf]
    %v207 = vld [vmem:[#allocation4 + $0x18] sm:$0xf]
    %v208 = vld [vmem:[#allocation4 + $0x1c] sm:$0xf]
    %v209 = vld [vmem:[#allocation4 + $0x20] sm:$0xf]
    %v210 = vld [vmem:[#allocation4 + $0x24] sm:$0xf]
    %v211 = vld [vmem:[#allocation4 + $0x28] sm:$0xf]
    %v212 = vld [vmem:[#allocation4 + $0x2c] sm:$0xf]
    %v213 = vld [vmem:[#allocation4 + $0x30] sm:$0xf]
    %v214 = vld [vmem:[#allocation4 + $0x34] sm:$0xf]
    %v215 = vld [vmem:[#allocation4 + $0x38] sm:$0xf]
    %v216 = vld [vmem:[#allocation4 + $0x3c] sm:$0xf]
    %v233 = vunpack.c.l.b16 %v201
    %v234 = vunpack.c.l.b16 %v202
    %v235 = vunpack.c.l.b16 %v203
    %v236 = vunpack.c.l.b16 %v204
    %v237 = vunpack.c.l.b16 %v205
    %v238 = vunpack.c.l.b16 %v206
    %v239 = vunpack.c.l.b16 %v207
    %v240 = vunpack.c.l.b16 %v208
    %v241 = vunpack.c.l.b16 %v209
    %v242 = vunpack.c.l.b16 %v210
    %v243 = vunpack.c.l.b16 %v211
    %v244 = vunpack.c.l.b16 %v212
    %v245 = vunpack.c.l.b16 %v213
    %v246 = vunpack.c.l.b16 %v214
    %v247 = vunpack.c.l.b16 %v215
    %v248 = vunpack.c.l.b16 %v216
    %v249 = vpack.c.b16 %v234, %v233
    %v250 = vpack.c.b16 %v236, %v235
    %v251 = vpack.c.b16 %v238, %v237
    %v252 = vpack.c.b16 %v240, %v239
    %v253 = vpack.c.b16 %v242, %v241
    %v254 = vpack.c.b16 %v244, %v243
    %v255 = vpack.c.b16 %v246, %v245
    %v256 = vpack.c.b16 %v248, %v247
    %265 = vmatpush.bf16.msra.mxu0 %v256
    %266 = vmatpush.bf16.msra.mxu0 %v255
    %267 = vmatpush.bf16.msra.mxu0 %v254
    %268 = vmatpush.bf16.msra.mxu0 %v253
    %269 = vmatpush.bf16.msra.mxu0 %v252
    %270 = vmatpush.bf16.msra.mxu0 %v251
    %271 = vmatpush.bf16.msra.mxu0 %v250
    %272 = vmatpush.bf16.msra.mxu0 %v249
    %273 = vmatmul.bf16.gmra.mxu0 %v200
    %v274 = vpop.f32.mrf.mxu0
    %v275 = vadd.f32 0.0, %v274
    %v276 = vpop.f32.mrf.mxu0
    %v277 = vadd.f32 0.0, %v276
    %278 = vdwg.mxu0
    %v279 = vld [vmem:[%s4] sm:$0x3]
    %v280 = vadd.f32 %v275, %v277
    %v281 = vrot.slane %v280, 4
    %v282 = vadd.f32 %v280, %v281
    %v283 = vrot.slane %v282, 2
    %v284 = vadd.f32 %v282, %v283
    %v285 = vrot.slane %v284, 1
    %v286 = vadd.f32 %v284, %v285
    %v287 = vmul.f32 %v286, 0.0625
    %v288 = vsub.f32 %v275, %v287
    %v289 = vsub.f32 %v277, %v287
    %v290 = vmul.f32 %v288, %v288
    %v291 = vmul.f32 %v289, %v289
    %v292 = vadd.f32 %v290, %v291
    %v293 = vrot.slane %v292, 4
    %v294 = vadd.f32 %v292, %v293
    %v295 = vrot.slane %v294, 2
    %v296 = vadd.f32 %v294, %v295
    %v297 = vrot.slane %v296, 1
    %v298 = vadd.f32 %v296, %v297
    %v299 = vmul.f32 %v298, 0.0625
    %v300 = vadd.f32 %v299, 1e-05
    %v301 = vrsqrt.pop %v300
    %v302 = vmul.f32 %v301, %v300
    %v303 = vmul.f32 %v302, %v301
    %v304 = vmul.f32 0.5, %v303
    %v305 = vsub.f32 1.5, %v304
    %v306 = vmul.f32 %v301, %v305
    %vm307 = vweird.f32 %v300
    %vm308 = vweird.f32 %v301
    %vm309 = vmor %vm307, %vm308
    %v310 = vsel %vm309, %v301, %v306
    %v311 = vmul.f32 %v279, %v310
    %v312 = vperm.slane %v311, 0
    %v313 = vmul.f32 %v288, %v312
    %v314 = vmul.f32 %v289, %v312
    %v315 = vperm.slane %v279, 1
    %v316 = vadd.f32 %v313, %v315
    %v317 = vadd.f32 %v314, %v315
    %v318 = vmax.f32 %v316, 0.0
    %v319 = vmax.f32 %v317, 0.0
    %v320 = vpack.c.bf16 %v319, %v318
    %v321 = vld [vmem:[#allocation6] sm:$0xf]
    %v322 = vld [vmem:[#allocation6 + $0x4] sm:$0xf]
    %v323 = vld [vmem:[#allocation6 + $0x8] sm:$0xf]
    %v324 = vld [vmem:[#allocation6 + $0xc] sm:$0xf]
    %v325 = vld [vmem:[#allocation6 + $0x10] sm:$0xf]
    %v326 = vld [vmem:[#allocation6 + $0x14] sm:$0xf]
    %v327 = vld [vmem:[#allocation6 + $0x18] sm:$0xf]
    %v328 = vld [vmem:[#allocation6 + $0x1c] sm:$0xf]
    %v329 = vld [vmem:[#allocation6 + $0x20] sm:$0xf]
    %v330 = vld [vmem:[#allocation6 + $0x24] sm:$0xf]
    %v331 = vld [vmem:[#allocation6 + $0x28] sm:$0xf]
    %v332 = vld [vmem:[#allocation6 + $0x2c] sm:$0xf]
    %v333 = vld [vmem:[#allocation6 + $0x30] sm:$0xf]
    %v334 = vld [vmem:[#allocation6 + $0x34] sm:$0xf]
    %v335 = vld [vmem:[#allocation6 + $0x38] sm:$0xf]
    %v336 = vld [vmem:[#allocation6 + $0x3c] sm:$0xf]
    %v337 = vld [vmem:[%s6] sm:$0x1]
    %v339 = vperm.slane %v337, 0
    %v357 = vunpack.c.l.b16 %v321
    %v358 = vunpack.c.l.b16 %v322
    %v359 = vunpack.c.l.b16 %v323
    %v360 = vunpack.c.l.b16 %v324
    %v361 = vunpack.c.l.b16 %v325
    %v362 = vunpack.c.l.b16 %v326
    %v363 = vunpack.c.l.b16 %v327
    %v364 = vunpack.c.l.b16 %v328
    %v365 = vunpack.c.l.b16 %v329
    %v366 = vunpack.c.l.b16 %v330
    %v367 = vunpack.c.l.b16 %v331
    %v368 = vunpack.c.l.b16 %v332
    %v369 = vunpack.c.l.b16 %v333
    %v370 = vunpack.c.l.b16 %v334
    %v371 = vunpack.c.l.b16 %v335
    %v372 = vunpack.c.l.b16 %v336
    %v373 = vpack.c.b16 %v358, %v357
    %v374 = vpack.c.b16 %v360, %v359
    %v375 = vpack.c.b16 %v362, %v361
    %v376 = vpack.c.b16 %v364, %v363
    %v377 = vpack.c.b16 %v366, %v365
    %v378 = vpack.c.b16 %v368, %v367
    %v379 = vpack.c.b16 %v370, %v369
    %v380 = vpack.c.b16 %v372, %v371
    %389 = vmatpush.bf16.msra.mxu0 %v380
    %390 = vmatpush.bf16.msra.mxu0 %v379
    %391 = vmatpush.bf16.msra.mxu0 %v378
    %392 = vmatpush.bf16.msra.mxu0 %v377
    %393 = vmatpush.bf16.msra.mxu0 %v376
    %394 = vmatpush.bf16.msra.mxu0 %v375
    %395 = vmatpush.bf16.msra.mxu0 %v374
    %396 = vmatpush.bf16.msra.mxu0 %v373
    %397 = vmatmul.bf16.gmra.mxu0 %v320
    %v398 = vpop.f32.mrf.mxu0
    %v399 = vadd.f32 %v339, %v398
    %v400 = vpop.f32.mrf.mxu0
    %v401 = vadd.f32 %v339, %v400
    %402 = vdwg.mxu0
    %403 = vst [vmem:[%s7] sm:$0xff] %v399
    %404 = vst [vmem:[%s7 + $0x8] sm:$0xff] %v401
    // Predicated region
    $region42: #{_forward_impl.1} parent=1 // pred_check
      _
    $region43: #{_forward_impl.1} parent=1 // pred_check_branch
      %406 = sbr.rel (0) target = $region45
    $region44: #{_forward_impl.1} parent=1 // pred_region
      _
    $region45: #{_forward_impl.1} parent=1 // pred_fallthru
      _
    // Predicated region
    $region46: #{_forward_impl.1} parent=1 // pred_check
      _
    $region47: #{_forward_impl.1} parent=1 // pred_check_branch
      %408 = sbr.rel (0) target = $region49
    $region48: #{_forward_impl.1} parent=1 // pred_region
      _
    $region49: #{_forward_impl.1} parent=1 // pred_fallthru
      _
    %409 = vsyncpa [#allocation3], 1
    %410 = vsyncpa [#allocation5], 1

</llo_original>
